<compile_context>
chip_gen: v6e
topology: v6e:2x2x1
jax: 0.10.0
libtpu: 0.0.40
codegen_flags: <defaults>
</compile_context>

<pallas_src>
import jax
import jax.numpy as jnp
from jax.experimental import pallas as pl
from jax.experimental.pallas import tpu as pltpu

_NEG_BIG = -1e30        # bias value for padded output lanes -> exp() == 0
_LANE = 128             # lane width: output padded to a multiple of this


def gating_kernel(x_ref,
                  w0_ref, b0_ref,
                  w1_ref, b1_ref,
                  w2_ref, b2_ref,
                  w3_ref, b3_ref,
                  scale_ref,
                  o_ref):
    """One (TILE_B, *) batch tile of the GatingNetwork forward."""
    x = x_ref[...]

    # hidden layer 0
    h = jnp.dot(x, w0_ref[...], preferred_element_type=jnp.float32) + b0_ref[...]
    h = jnp.maximum(h, 0.0)
    # hidden layer 1
    h = jnp.dot(h, w1_ref[...], preferred_element_type=jnp.float32) + b1_ref[...]
    h = jnp.maximum(h, 0.0)
    # hidden layer 2
    h = jnp.dot(h, w2_ref[...], preferred_element_type=jnp.float32) + b2_ref[...]
    h = jnp.maximum(h, 0.0)

    # output layer — 1/temperature already folded into w3/b3; padded lanes
    # carry a large negative bias so they contribute exactly 0 after exp.
    z = jnp.dot(h, w3_ref[...], preferred_element_type=jnp.float32) + b3_ref[...]

    # numerically-stable softmax over the lane (feature) axis
    m = jnp.max(z, axis=-1, keepdims=True)
    e = jnp.exp(z - m)
    s = jnp.sum(e, axis=-1, keepdims=True)

    # approx reciprocal -> EUP; fold logit_scale into the (TILE_B, 1) column
    o_ref[...] = e * (scale_ref[0] * pl.reciprocal(s, approx=True))


def _round_up(n, m):
    return ((n + m - 1) // m) * m


def prepare_params(params, temperature, *, lane=_LANE):
    """One-time parameter transform: fold 1/T into the last layer and pad its
    outputs to a lane-dense width.  Padded weight columns are zero and padded
    bias entries are a huge negative number so softmax ignores them."""
    w0, b0, w1, b1, w2, b2, w3, b3, logit_scale = params
    out_features = w3.shape[1]
    out_pad = _round_up(out_features, lane)
    pad = out_pad - out_features

    inv_t = jnp.float32(1.0 / temperature)
    w3p = jnp.pad(w3 * inv_t, ((0, 0), (0, pad)))
    b3p = jnp.pad(b3 * inv_t, ((0, 0), (0, pad)), constant_values=_NEG_BIG)

    prepared = (w0, b0, w1, b1, w2, b2, w3p, b3p, logit_scale)
    return prepared, out_features


def gating_forward(x, prepared_params, out_features, *, tile_b=512):
    """prepared_params: output of prepare_params (weights stored as (in, out))."""
    w0, b0, w1, b1, w2, b2, w3, b3, logit_scale = prepared_params
    batch, in_features = x.shape
    out_pad = w3.shape[1]

    # Batch tiling: multiples of 8 sublanes; pad the batch so it divides evenly.
    # Default tile_b=512 keeps the pipeline near HBM roofline while fitting
    # comfortably in v7x's 64 MiB VMEM with double-buffered x / out tiles.
    tile_b = min(tile_b, _round_up(batch, 8))
    batch_pad = _round_up(batch, tile_b)
    if batch_pad != batch:
        x = jnp.pad(x, ((0, batch_pad - batch), (0, 0)))

    grid = (batch_pad // tile_b,)

    def resident(shape):
        nd = len(shape)
        return pl.BlockSpec(shape, lambda i, _nd=nd: (0,) * _nd)

    in_specs = [
        pl.BlockSpec((tile_b, in_features), lambda i: (i, 0)),   # x: batch-tiled
        resident(w0.shape), resident(b0.shape),                  # weights stay
        resident(w1.shape), resident(b1.shape),                  # VMEM-resident
        resident(w2.shape), resident(b2.shape),                  # across steps
        resident(w3.shape), resident(b3.shape),
        pl.BlockSpec(memory_space=pltpu.MemorySpace.SMEM),       # logit_scale
    ]
    out_specs = pl.BlockSpec((tile_b, out_pad), lambda i: (i, 0))

    out = pl.pallas_call(
        gating_kernel,
        out_shape=jax.ShapeDtypeStruct((batch_pad, out_pad), jnp.float32),
        grid=grid,
        in_specs=in_specs,
        out_specs=out_specs,
        compiler_params=pltpu.CompilerParams(
            dimension_semantics=("parallel",)),   # megacore on v7x
    )(x, w0, b0, w1, b1, w2, b2, w3, b3, logit_scale)

    # strip batch padding and the lane padding of the output layer
    return out[:batch, :out_features]


def init_params(key, in_features, hidden_dim, out_features, n_hidden=3,
                logit_scale=1.0):
    """Deterministic synthetic init; weights stored as (in, out)."""
    dims = [in_features] + [hidden_dim] * n_hidden + [out_features]
    params = []
    for i in range(len(dims) - 1):
        key, kw, kb = jax.random.split(key, 3)
        fan_in = dims[i]
        w = jax.random.normal(kw, (dims[i], dims[i + 1]), jnp.float32) / jnp.sqrt(
            jnp.float32(fan_in))
        b = 0.01 * jax.random.normal(kb, (1, dims[i + 1]), jnp.float32)
        params.extend([w, b])
    params.append(jnp.full((1,), logit_scale, dtype=jnp.float32))
    return tuple(params)


def gating_reference(x, params, *, temperature: float):
    """Pure-JAX reference mirroring the torch forward (uses raw params)."""
    w0, b0, w1, b1, w2, b2, w3, b3, logit_scale = params
    h = jnp.maximum(x @ w0 + b0, 0.0)
    h = jnp.maximum(h @ w1 + b1, 0.0)
    h = jnp.maximum(h @ w2 + b2, 0.0)
    logits = h @ w3 + b3
    return jax.nn.softmax(logits / temperature, axis=1) * logit_scale[0]


if __name__ == "__main__":
    key = jax.random.PRNGKey(0)
    key, kx, kp = jax.random.split(key, 3)

    # small shapes consistent with the module's forward: x is (batch, in_features)
    batch, in_features, hidden_dim, out_features = 20, 16, 32, 4
    temperature = 10.0

    x = jax.random.normal(kx, (batch, in_features), jnp.float32)
    raw_params = init_params(kp, in_features, hidden_dim, out_features,
                             n_hidden=3, logit_scale=1.0)

    # one-time parameter prep (temperature fold + lane padding)
    prepared, out_f = prepare_params(raw_params, temperature)

    # tile_b=8 here so the small test exercises a multi-step grid (+ batch pad)
    out = gating_forward(x, prepared, out_f, tile_b=8)
    out = jax.block_until_ready(out)

    ref = gating_reference(x, raw_params, temperature=temperature)
    assert out.shape == (batch, out_features)
    # tolerance loosened vs 1e-5 because of pl.reciprocal(approx=True)
    assert jnp.allclose(out, ref, atol=1e-3, rtol=1e-3), float(
        jnp.max(jnp.abs(out - ref)))

    print("KERNEL_OK")
</pallas_src>

<mosaic_0001>
module attributes {stable_mosaic.version = 11 : i64} {
  func.func @gating_kernel(%arg0: i32, %arg1: memref<8x16xf32, #tpu.memory_space<vmem>>, %arg2: memref<16x32xf32, #tpu.memory_space<vmem>>, %arg3: memref<1x32xf32, #tpu.memory_space<vmem>>, %arg4: memref<32x32xf32, #tpu.memory_space<vmem>>, %arg5: memref<1x32xf32, #tpu.memory_space<vmem>>, %arg6: memref<32x32xf32, #tpu.memory_space<vmem>>, %arg7: memref<1x32xf32, #tpu.memory_space<vmem>>, %arg8: memref<32x128xf32, #tpu.memory_space<vmem>>, %arg9: memref<1x128xf32, #tpu.memory_space<vmem>>, %arg10: memref<1xf32, #tpu.memory_space<smem>>, %arg11: memref<8x128xf32, #tpu.memory_space<vmem>>) attributes {dimension_semantics = [#tpu.dimension_semantics<parallel>], iteration_bounds = array<i64: 3>, scalar_prefetch = 0 : i64, scratch_operands = 0 : i64, tpu.core_type = #tpu.core_type<tc>, window_params = [{transform_indices = @transform_0, window_bounds = array<i64: 8, 16>}, {pipeline_mode = #tpu.pipeline_mode<synchronous>, transform_indices = @transform_1, window_bounds = array<i64: 16, 32>}, {pipeline_mode = #tpu.pipeline_mode<synchronous>, transform_indices = @transform_2, window_bounds = array<i64: 1, 32>}, {pipeline_mode = #tpu.pipeline_mode<synchronous>, transform_indices = @transform_3, window_bounds = array<i64: 32, 32>}, {pipeline_mode = #tpu.pipeline_mode<synchronous>, transform_indices = @transform_4, window_bounds = array<i64: 1, 32>}, {pipeline_mode = #tpu.pipeline_mode<synchronous>, transform_indices = @transform_5, window_bounds = array<i64: 32, 32>}, {pipeline_mode = #tpu.pipeline_mode<synchronous>, transform_indices = @transform_6, window_bounds = array<i64: 1, 32>}, {pipeline_mode = #tpu.pipeline_mode<synchronous>, transform_indices = @transform_7, window_bounds = array<i64: 32, 128>}, {pipeline_mode = #tpu.pipeline_mode<synchronous>, transform_indices = @transform_8, window_bounds = array<i64: 1, 128>}, {transform_indices = @transform_9, window_bounds = array<i64: 1>}, {transform_indices = @transform_10, window_bounds = array<i64: 8, 128>}]} {
    %c0 = arith.constant 0 : index
    %c0_0 = arith.constant 0 : index
    %0 = vector.load %arg1[%c0, %c0_0] : memref<8x16xf32, #tpu.memory_space<vmem>>, vector<8x16xf32>
    %c0_1 = arith.constant 0 : index
    %c0_2 = arith.constant 0 : index
    %1 = vector.load %arg2[%c0_1, %c0_2] : memref<16x32xf32, #tpu.memory_space<vmem>>, vector<16x32xf32>
    %cst = arith.constant dense<0.000000e+00> : vector<8x32xf32>
    %2 = tpu.matmul %0, %1, %cst {dimension_numbers = #tpu.dot_dimension_numbers<[1], [0], [0], [1], [0, 0, 1, 1], [], []>} : vector<8x16xf32>, vector<16x32xf32>, vector<8x32xf32> -> vector<8x32xf32>
    %c0_3 = arith.constant 0 : index
    %c0_4 = arith.constant 0 : index
    %3 = vector.load %arg3[%c0_3, %c0_4] : memref<1x32xf32, #tpu.memory_space<vmem>>, vector<1x32xf32>
    %4 = vector.broadcast %3 : vector<1x32xf32> to vector<8x32xf32>
    %5 = arith.addf %2, %4 : vector<8x32xf32>
    %cst_5 = arith.constant 0.000000e+00 : f32
    %6 = vector.broadcast %cst_5 : f32 to vector<8x32xf32>
    %7 = arith.maximumf %5, %6 : vector<8x32xf32>
    %c0_6 = arith.constant 0 : index
    %c0_7 = arith.constant 0 : index
    %8 = vector.load %arg4[%c0_6, %c0_7] : memref<32x32xf32, #tpu.memory_space<vmem>>, vector<32x32xf32>
    %cst_8 = arith.constant dense<0.000000e+00> : vector<8x32xf32>
    %9 = tpu.matmul %7, %8, %cst_8 {dimension_numbers = #tpu.dot_dimension_numbers<[1], [0], [0], [1], [0, 0, 1, 1], [], []>} : vector<8x32xf32>, vector<32x32xf32>, vector<8x32xf32> -> vector<8x32xf32>
    %c0_9 = arith.constant 0 : index
    %c0_10 = arith.constant 0 : index
    %10 = vector.load %arg5[%c0_9, %c0_10] : memref<1x32xf32, #tpu.memory_space<vmem>>, vector<1x32xf32>
    %11 = vector.broadcast %10 : vector<1x32xf32> to vector<8x32xf32>
    %12 = arith.addf %9, %11 : vector<8x32xf32>
    %cst_11 = arith.constant 0.000000e+00 : f32
    %13 = vector.broadcast %cst_11 : f32 to vector<8x32xf32>
    %14 = arith.maximumf %12, %13 : vector<8x32xf32>
    %c0_12 = arith.constant 0 : index
    %c0_13 = arith.constant 0 : index
    %15 = vector.load %arg6[%c0_12, %c0_13] : memref<32x32xf32, #tpu.memory_space<vmem>>, vector<32x32xf32>
    %cst_14 = arith.constant dense<0.000000e+00> : vector<8x32xf32>
    %16 = tpu.matmul %14, %15, %cst_14 {dimension_numbers = #tpu.dot_dimension_numbers<[1], [0], [0], [1], [0, 0, 1, 1], [], []>} : vector<8x32xf32>, vector<32x32xf32>, vector<8x32xf32> -> vector<8x32xf32>
    %c0_15 = arith.constant 0 : index
    %c0_16 = arith.constant 0 : index
    %17 = vector.load %arg7[%c0_15, %c0_16] : memref<1x32xf32, #tpu.memory_space<vmem>>, vector<1x32xf32>
    %18 = vector.broadcast %17 : vector<1x32xf32> to vector<8x32xf32>
    %19 = arith.addf %16, %18 : vector<8x32xf32>
    %cst_17 = arith.constant 0.000000e+00 : f32
    %20 = vector.broadcast %cst_17 : f32 to vector<8x32xf32>
    %21 = arith.maximumf %19, %20 : vector<8x32xf32>
    %c0_18 = arith.constant 0 : index
    %c0_19 = arith.constant 0 : index
    %22 = vector.load %arg8[%c0_18, %c0_19] : memref<32x128xf32, #tpu.memory_space<vmem>>, vector<32x128xf32>
    %cst_20 = arith.constant dense<0.000000e+00> : vector<8x128xf32>
    %23 = tpu.matmul %21, %22, %cst_20 {dimension_numbers = #tpu.dot_dimension_numbers<[1], [0], [0], [1], [0, 0, 1, 1], [], []>} : vector<8x32xf32>, vector<32x128xf32>, vector<8x128xf32> -> vector<8x128xf32>
    %c0_21 = arith.constant 0 : index
    %c0_22 = arith.constant 0 : index
    %24 = vector.load %arg9[%c0_21, %c0_22] : memref<1x128xf32, #tpu.memory_space<vmem>>, vector<1x128xf32>
    %25 = vector.broadcast %24 : vector<1x128xf32> to vector<8x128xf32>
    %26 = arith.addf %23, %25 : vector<8x128xf32>
    %cst_23 = arith.constant dense<0xFF800000> : vector<8xf32>
    %27 = vector.multi_reduction <maximumf>, %26, %cst_23 [1] : vector<8x128xf32> to vector<8xf32>
    %28 = vector.shape_cast %27 : vector<8xf32> to vector<8x1xf32>
    %29 = vector.broadcast %28 : vector<8x1xf32> to vector<8x128xf32>
    %30 = arith.subf %26, %29 : vector<8x128xf32>
    %31 = math.exp %30 : vector<8x128xf32>
    %cst_24 = arith.constant dense<0.000000e+00> : vector<8xf32>
    %32 = vector.multi_reduction <add>, %31, %cst_24 [1] : vector<8x128xf32> to vector<8xf32>
    %33 = vector.shape_cast %32 : vector<8xf32> to vector<8x1xf32>
    %c0_25 = arith.constant 0 : index
    %34 = memref.load %arg10[%c0_25] : memref<1xf32, #tpu.memory_space<smem>>
    %35 = tpu.reciprocal %33 {approx = true} : vector<8x1xf32> -> vector<8x1xf32>
    %36 = vector.broadcast %34 : f32 to vector<8x1xf32>
    %37 = arith.mulf %36, %35 : vector<8x1xf32>
    %38 = vector.broadcast %37 : vector<8x1xf32> to vector<8x128xf32>
    %39 = arith.mulf %31, %38 : vector<8x128xf32>
    %c0_26 = arith.constant 0 : index
    %c0_27 = arith.constant 0 : index
    %40 = vector.load %arg11[%c0_26, %c0_27] : memref<8x128xf32, #tpu.memory_space<vmem>>, vector<8x128xf32>
    tpu.vector_store %arg11[%c0_26, %c0_27], %39 {strides = array<i32>} : memref<8x128xf32, #tpu.memory_space<vmem>>, vector<8x128xf32>,
    return
  }
  func.func @transform_0(%arg0: i32) -> (i32, i32) {
    %c0_i32 = arith.constant 0 : i32
    %c0_i32_0 = arith.constant 0 : i32
    return %arg0, %c0_i32 : i32, i32
  }
  func.func @transform_1(%arg0: i32) -> (i32, i32) {
    %c0_i32 = arith.constant 0 : i32
    %c0_i32_0 = arith.constant 0 : i32
    %c0_i32_1 = arith.constant 0 : i32
    return %c0_i32, %c0_i32_0 : i32, i32
  }
  func.func @transform_2(%arg0: i32) -> (i32, i32) {
    %c0_i32 = arith.constant 0 : i32
    %c0_i32_0 = arith.constant 0 : i32
    %c0_i32_1 = arith.constant 0 : i32
    return %c0_i32, %c0_i32_0 : i32, i32
  }
  func.func @transform_3(%arg0: i32) -> (i32, i32) {
    %c0_i32 = arith.constant 0 : i32
    %c0_i32_0 = arith.constant 0 : i32
    %c0_i32_1 = arith.constant 0 : i32
    return %c0_i32, %c0_i32_0 : i32, i32
  }
  func.func @transform_4(%arg0: i32) -> (i32, i32) {
    %c0_i32 = arith.constant 0 : i32
    %c0_i32_0 = arith.constant 0 : i32
    %c0_i32_1 = arith.constant 0 : i32
    return %c0_i32, %c0_i32_0 : i32, i32
  }
  func.func @transform_5(%arg0: i32) -> (i32, i32) {
    %c0_i32 = arith.constant 0 : i32
    %c0_i32_0 = arith.constant 0 : i32
    %c0_i32_1 = arith.constant 0 : i32
    return %c0_i32, %c0_i32_0 : i32, i32
  }
  func.func @transform_6(%arg0: i32) -> (i32, i32) {
    %c0_i32 = arith.constant 0 : i32
    %c0_i32_0 = arith.constant 0 : i32
    %c0_i32_1 = arith.constant 0 : i32
    return %c0_i32, %c0_i32_0 : i32, i32
  }
  func.func @transform_7(%arg0: i32) -> (i32, i32) {
    %c0_i32 = arith.constant 0 : i32
    %c0_i32_0 = arith.constant 0 : i32
    %c0_i32_1 = arith.constant 0 : i32
    return %c0_i32, %c0_i32_0 : i32, i32
  }
  func.func @transform_8(%arg0: i32) -> (i32, i32) {
    %c0_i32 = arith.constant 0 : i32
    %c0_i32_0 = arith.constant 0 : i32
    %c0_i32_1 = arith.constant 0 : i32
    return %c0_i32, %c0_i32_0 : i32, i32
  }
  func.func @transform_9(%arg0: i32) -> i32 {
    %c0_i32 = arith.constant 0 : i32
    %c0_i32_0 = arith.constant 0 : i32
    return %c0_i32 : i32
  }
  func.func @transform_10(%arg0: i32) -> (i32, i32) {
    %c0_i32 = arith.constant 0 : i32
    %c0_i32_0 = arith.constant 0 : i32
    return %arg0, %c0_i32 : i32, i32
  }
}

</mosaic_0001>

<llo_original>
// kernel: tpu_custom_call.1
$region0: #{tpu_custom_call.1}
  #allocation0 [shape = 'u32[]', space=smem, size = 0x4, offset = 0x4, fixed_abs, tag = 'smem constant byte address 0x4 - core index']
  #allocation1 [shape = 'u32[144,128]{1,0:T(1,128)}', space=vmem, size = 0x12000, scoped, tag = 'internal scratch']
  #allocation2 [shape = 'f32[1]{0:T(128)S(6)}', space=smem, size = 0x200, scoped, tag = 'scoped memory for tpu_custom_call.1']
  %s0 = inlined_call_operand.vmem [shape: f32[24,16], index: 0, kind: input, shape index: {}]
  %s1 = inlined_call_operand.hbm [shape: f32[16,32], index: 1, kind: input, shape index: {}]
  %s2 = inlined_call_operand.vmem [shape: f32[1,32], index: 2, kind: input, shape index: {}]
  %s3 = inlined_call_operand.vmem [shape: f32[32,32], index: 3, kind: input, shape index: {}]
  %s4 = inlined_call_operand.vmem [shape: f32[1,32], index: 4, kind: input, shape index: {}]
  %s5 = inlined_call_operand.hbm [shape: f32[32,32], index: 5, kind: input, shape index: {}]
  %s6 = inlined_call_operand.vmem [shape: f32[1,32], index: 6, kind: input, shape index: {}]
  %s7 = inlined_call_operand.hbm [shape: f32[32,128], index: 7, kind: input, shape index: {}]
  %s8 = inlined_call_operand.vmem [shape: f32[1,128], index: 8, kind: input, shape index: {}]
  %s9 = inlined_call_operand.<no memory space> [shape: f32[1], index: 9, kind: input, shape index: {}]
  %s10 = inlined_call_operand.hbm [shape: f32[24,128], index: 10, kind: output, shape index: {}]
  %s11 = sld [smem:[#allocation0]]
  $region85: #{tpu_custom_call.1} parent=0
    _
  %s13 = ssub.s32 1, %s11
  %s14 = scalar_select 0, %s13, %s11
  %15 = sst [smem:[#allocation2]] %s9
  $region1: #{tpu_custom_call.1} parent=0
    #allocation3 [shape = 'u8[8192]{0}', space=vmem, size = 0x2000, scoped, tag = 'input window, operand 1, single buffered']
    #allocation4 [shape = 's32[2]{0}', space=sflag, size = 0x8, scoped, tag = 'scoped memory for tpu_custom_call.1']
    #allocation5 [shape = 's32[2]{0}', space=sflag, size = 0x8, scoped, tag = 'scoped memory for tpu_custom_call.1']
    #allocation6 [shape = 'u8[16384]{0}', space=vmem, size = 0x4000, scoped, tag = 'input window, operand 5, single buffered']
    #allocation7 [shape = 's32[1]{0}', space=sflag, size = 0x4, scoped, tag = 'scoped memory for tpu_custom_call.1']
    #allocation8 [shape = 'u8[16384]{0}', space=vmem, size = 0x4000, scoped, tag = 'input window, operand 7, single buffered']
    #allocation9 [shape = 'u8[8192]{0}', space=vmem, size = 0x2000, scoped, tag = 'output window, operand 0']
    %16 = vsyncpa [#allocation4], 0
    %17 = vsyncpa [#allocation7], 0
    %18 = vsyncpa [#allocation5], 0
    %s19 = scalar_lea.sflag [#allocation5], 1
    %20 = vsyncpa %s19, 0
    loop: start=0, step=1, limit=5
    $region2: #{tpu_custom_call.1} parent=1 // loop_pre_header
      _
    $region3: #{tpu_custom_call.1} parent=1 // loop_header
      %s22 = sphi 0, %s26
      %p23 = scmp.ge.s32.totalorder %s22, 5
      %s32 = sphi 0, %s34
      %s35 = sphi 0, %s32
      %s36 = sphi 0, %s35
      %s52 = sphi 0, %s36
      %s56 = sphi 0, %s56
      %s58 = sphi 0, %s56
      %s59 = sphi 0, %s58
      %s73 = sphi 0, %s59
      %s77 = sphi 0, %s77
      %s79 = sphi 0, %s77
      %s80 = sphi 0, %s79
      %s94 = sphi 0, %s80
      %s98 = sphi 0, %s98
      %s100 = sphi 0, %s98
      %s101 = sphi 0, %s100
      %s115 = sphi 0, %s101
      %s119 = sphi 0, %s119
      %s121 = sphi 0, %s119
      %s122 = sphi 0, %s121
      %s136 = sphi 0, %s122
      %s140 = sphi 0, %s140
      %s142 = sphi 0, %s140
      %s143 = sphi 0, %s142
      %s157 = sphi 0, %s143
      %s161 = sphi 0, %s161
      %s163 = sphi 0, %s161
      %s164 = sphi 0, %s163
      %s178 = sphi 0, %s164
      %s182 = sphi 0, %s182
      %s184 = sphi 0, %s182
      %s185 = sphi 0, %s184
      %s199 = sphi 0, %s185
      %s203 = sphi 0, %s203
      %s205 = sphi 0, %s203
      %s206 = sphi 0, %s205
      %s220 = sphi 0, %s206
      %s224 = sphi 0, %s224
      %s226 = sphi 0, %s224
      %s227 = sphi 0, %s226
      %s241 = sphi 0, %s227
      %s247 = sphi 0, %s249
      %s250 = sphi 0, %s247
      %s251 = sphi 0, %s250
      %s267 = sphi 0, %s251
    $region4: #{tpu_custom_call.1} parent=1 // loop_header_branch
      %25 = sbr.rel (%p23) target = $region8
    $region5: #{tpu_custom_call.1} parent=1 // loop_body
      %s27 = ssub.s32 %s22, 1
      %s28 = ssub.s32 %s22, 2
      %s29 = sadd.s32 %s22, 1
      %s30 = ssub.s32 %s22, %s29
      %p31 = scmp.eq.s32.totalorder %s30, 0
      %s33 = sadd.s32 %s32, 1
      %s34 = scalar_select %p31, %s32, %s33
      %p37 = pneg %p31
      %p38 = scmp.eq.s32.totalorder %s22, 2
      %p39 = por %p37, %p38
      %p40 = scmp.ne.s32.totalorder %s32, %s35
      %p41 = scmp.eq.s32.totalorder %s22, 0
      %p42 = por %p40, %p41
      %p43 = scmp.ne.s32.totalorder %s32, %s35
      %p44 = scmp.eq.s32.totalorder %s27, 2
      %p45 = por %p43, %p44
      %p46 = scmp.ne.s32.totalorder %s35, %s36
      %p47 = scmp.eq.s32.totalorder %s27, 0
      %p48 = por %p46, %p47
      %p49 = scmp.ne.s32.totalorder %s35, %s36
      %p50 = scmp.eq.s32.totalorder %s28, 2
      %p51 = por %p49, %p50
      %p53 = scmp.ne.s32.totalorder %s36, %s52
      %p54 = scmp.eq.s32.totalorder %s28, 0
      %p55 = por %p53, %p54
      %s57 = sadd.s32 %s56, 1
      %p60 = scmp.eq.s32.totalorder %s22, 2
      %p61 = scmp.ne.s32.totalorder %s56, %s58
      %p62 = scmp.eq.s32.totalorder %s22, 0
      %p63 = por %p61, %p62
      %p64 = scmp.ne.s32.totalorder %s56, %s58
      %p65 = scmp.eq.s32.totalorder %s27, 2
      %p66 = por %p64, %p65
      %p67 = scmp.ne.s32.totalorder %s58, %s59
      %p68 = scmp.eq.s32.totalorder %s27, 0
      %p69 = por %p67, %p68
      %p70 = scmp.ne.s32.totalorder %s58, %s59
      %p71 = scmp.eq.s32.totalorder %s28, 2
      %p72 = por %p70, %p71
      %p74 = scmp.ne.s32.totalorder %s59, %s73
      %p75 = scmp.eq.s32.totalorder %s28, 0
      %p76 = por %p74, %p75
      %s78 = sadd.s32 %s77, 1
      %p81 = scmp.eq.s32.totalorder %s22, 2
      %p82 = scmp.ne.s32.totalorder %s77, %s79
      %p83 = scmp.eq.s32.totalorder %s22, 0
      %p84 = por %p82, %p83
      %p85 = scmp.ne.s32.totalorder %s77, %s79
      %p86 = scmp.eq.s32.totalorder %s27, 2
      %p87 = por %p85, %p86
      %p88 = scmp.ne.s32.totalorder %s79, %s80
      %p89 = scmp.eq.s32.totalorder %s27, 0
      %p90 = por %p88, %p89
      %p91 = scmp.ne.s32.totalorder %s79, %s80
      %p92 = scmp.eq.s32.totalorder %s28, 2
      %p93 = por %p91, %p92
      %p95 = scmp.ne.s32.totalorder %s80, %s94
      %p96 = scmp.eq.s32.totalorder %s28, 0
      %p97 = por %p95, %p96
      %s99 = sadd.s32 %s98, 1
      %p102 = scmp.eq.s32.totalorder %s22, 2
      %p103 = scmp.ne.s32.totalorder %s98, %s100
      %p104 = scmp.eq.s32.totalorder %s22, 0
      %p105 = por %p103, %p104
      %p106 = scmp.ne.s32.totalorder %s98, %s100
      %p107 = scmp.eq.s32.totalorder %s27, 2
      %p108 = por %p106, %p107
      %p109 = scmp.ne.s32.totalorder %s100, %s101
      %p110 = scmp.eq.s32.totalorder %s27, 0
      %p111 = por %p109, %p110
      %p112 = scmp.ne.s32.totalorder %s100, %s101
      %p113 = scmp.eq.s32.totalorder %s28, 2
      %p114 = por %p112, %p113
      %p116 = scmp.ne.s32.totalorder %s101, %s115
      %p117 = scmp.eq.s32.totalorder %s28, 0
      %p118 = por %p116, %p117
      %s120 = sadd.s32 %s119, 1
      %p123 = scmp.eq.s32.totalorder %s22, 2
      %p124 = scmp.ne.s32.totalorder %s119, %s121
      %p125 = scmp.eq.s32.totalorder %s22, 0
      %p126 = por %p124, %p125
      %p127 = scmp.ne.s32.totalorder %s119, %s121
      %p128 = scmp.eq.s32.totalorder %s27, 2
      %p129 = por %p127, %p128
      %p130 = scmp.ne.s32.totalorder %s121, %s122
      %p131 = scmp.eq.s32.totalorder %s27, 0
      %p132 = por %p130, %p131
      %p133 = scmp.ne.s32.totalorder %s121, %s122
      %p134 = scmp.eq.s32.totalorder %s28, 2
      %p135 = por %p133, %p134
      %p137 = scmp.ne.s32.totalorder %s122, %s136
      %p138 = scmp.eq.s32.totalorder %s28, 0
      %p139 = por %p137, %p138
      %s141 = sadd.s32 %s140, 1
      %p144 = scmp.eq.s32.totalorder %s22, 2
      %p145 = scmp.ne.s32.totalorder %s140, %s142
      %p146 = scmp.eq.s32.totalorder %s22, 0
      %p147 = por %p145, %p146
      %p148 = scmp.ne.s32.totalorder %s140, %s142
      %p149 = scmp.eq.s32.totalorder %s27, 2
      %p150 = por %p148, %p149
      %p151 = scmp.ne.s32.totalorder %s142, %s143
      %p152 = scmp.eq.s32.totalorder %s27, 0
      %p153 = por %p151, %p152
      %p154 = scmp.ne.s32.totalorder %s142, %s143
      %p155 = scmp.eq.s32.totalorder %s28, 2
      %p156 = por %p154, %p155
      %p158 = scmp.ne.s32.totalorder %s143, %s157
      %p159 = scmp.eq.s32.totalorder %s28, 0
      %p160 = por %p158, %p159
      %s162 = sadd.s32 %s161, 1
      %p165 = scmp.eq.s32.totalorder %s22, 2
      %p166 = scmp.ne.s32.totalorder %s161, %s163
      %p167 = scmp.eq.s32.totalorder %s22, 0
      %p168 = por %p166, %p167
      %p169 = scmp.ne.s32.totalorder %s161, %s163
      %p170 = scmp.eq.s32.totalorder %s27, 2
      %p171 = por %p169, %p170
      %p172 = scmp.ne.s32.totalorder %s163, %s164
      %p173 = scmp.eq.s32.totalorder %s27, 0
      %p174 = por %p172, %p173
      %p175 = scmp.ne.s32.totalorder %s163, %s164
      %p176 = scmp.eq.s32.totalorder %s28, 2
      %p177 = por %p175, %p176
      %p179 = scmp.ne.s32.totalorder %s164, %s178
      %p180 = scmp.eq.s32.totalorder %s28, 0
      %p181 = por %p179, %p180
      %s183 = sadd.s32 %s182, 1
      %p186 = scmp.eq.s32.totalorder %s22, 2
      %p187 = scmp.ne.s32.totalorder %s182, %s184
      %p188 = scmp.eq.s32.totalorder %s22, 0
      %p189 = por %p187, %p188
      %p190 = scmp.ne.s32.totalorder %s182, %s184
      %p191 = scmp.eq.s32.totalorder %s27, 2
      %p192 = por %p190, %p191
      %p193 = scmp.ne.s32.totalorder %s184, %s185
      %p194 = scmp.eq.s32.totalorder %s27, 0
      %p195 = por %p193, %p194
      %p196 = scmp.ne.s32.totalorder %s184, %s185
      %p197 = scmp.eq.s32.totalorder %s28, 2
      %p198 = por %p196, %p197
      %p200 = scmp.ne.s32.totalorder %s185, %s199
      %p201 = scmp.eq.s32.totalorder %s28, 0
      %p202 = por %p200, %p201
      %s204 = sadd.s32 %s203, 1
      %p207 = scmp.eq.s32.totalorder %s22, 2
      %p208 = scmp.ne.s32.totalorder %s203, %s205
      %p209 = scmp.eq.s32.totalorder %s22, 0
      %p210 = por %p208, %p209
      %p211 = scmp.ne.s32.totalorder %s203, %s205
      %p212 = scmp.eq.s32.totalorder %s27, 2
      %p213 = por %p211, %p212
      %p214 = scmp.ne.s32.totalorder %s205, %s206
      %p215 = scmp.eq.s32.totalorder %s27, 0
      %p216 = por %p214, %p215
      %p217 = scmp.ne.s32.totalorder %s205, %s206
      %p218 = scmp.eq.s32.totalorder %s28, 2
      %p219 = por %p217, %p218
      %p221 = scmp.ne.s32.totalorder %s206, %s220
      %p222 = scmp.eq.s32.totalorder %s28, 0
      %p223 = por %p221, %p222
      %s225 = sadd.s32 %s224, 1
      %p228 = scmp.eq.s32.totalorder %s22, 2
      %p229 = scmp.ne.s32.totalorder %s224, %s226
      %p230 = scmp.eq.s32.totalorder %s22, 0
      %p231 = por %p229, %p230
      %p232 = scmp.ne.s32.totalorder %s224, %s226
      %p233 = scmp.eq.s32.totalorder %s27, 2
      %p234 = por %p232, %p233
      %p235 = scmp.ne.s32.totalorder %s226, %s227
      %p236 = scmp.eq.s32.totalorder %s27, 0
      %p237 = por %p235, %p236
      %p238 = scmp.ne.s32.totalorder %s226, %s227
      %p239 = scmp.eq.s32.totalorder %s28, 2
      %p240 = por %p238, %p239
      %p242 = scmp.ne.s32.totalorder %s227, %s241
      %p243 = scmp.eq.s32.totalorder %s28, 0
      %p244 = por %p242, %p243
      %s245 = ssub.s32 %s22, %s29
      %p246 = scmp.eq.s32.totalorder %s245, 0
      %s248 = sadd.s32 %s247, 1
      %s249 = scalar_select %p246, %s247, %s248
      %p252 = pneg %p246
      %p253 = scmp.eq.s32.totalorder %s22, 2
      %p254 = por %p252, %p253
      %p255 = scmp.ne.s32.totalorder %s247, %s250
      %p256 = scmp.eq.s32.totalorder %s22, 0
      %p257 = por %p255, %p256
      %p258 = scmp.ne.s32.totalorder %s247, %s250
      %p259 = scmp.eq.s32.totalorder %s27, 2
      %p260 = por %p258, %p259
      %p261 = scmp.ne.s32.totalorder %s250, %s251
      %p262 = scmp.eq.s32.totalorder %s27, 0
      %p263 = por %p261, %p262
      %p264 = scmp.ne.s32.totalorder %s250, %s251
      %p265 = scmp.eq.s32.totalorder %s28, 2
      %p266 = por %p264, %p265
      %p268 = scmp.ne.s32.totalorder %s251, %s267
      %p269 = scmp.eq.s32.totalorder %s28, 0
      %p270 = por %p268, %p269
      %p271 = scmp.le.s32.totalorder 1, %s22
      %p272 = scmp.lt.s32.totalorder %s22, 4
      %p273 = pnand %p271, %p272
      %p274 = pneg %p273
      // Predicated region
      $region9: #{tpu_custom_call.1} parent=5 // pred_check
        _
      $region10: #{tpu_custom_call.1} parent=5 // pred_check_branch
        %276 = sbr.rel (%p273) target = $region12
      $region11: #{tpu_custom_call.1} parent=5 // pred_region
        %s277 = ssub.s32 %s22, 1
        // Predicated region
        $region13: #{tpu_custom_call.1} parent=11 // pred_check
          %p278 = pneg %p69
        $region14: #{tpu_custom_call.1} parent=11 // pred_check_branch
          %280 = sbr.rel (%p278) target = $region16
        $region15: #{tpu_custom_call.1} parent=11 // pred_region
          %s282 = ssub.s32 256, 256
          %283 = vsyncadd [#allocation4], %s282
          %s284 = sshll.u32 [#allocation3], 4
          %s285 = int_to_ptr.vmem [resolvable:$true] %s284
          %290 = dma.hbm_to_vmem [thread:$0]  %s1, 256, %s285, [#allocation4], 128, 128, 8
        $region16: #{tpu_custom_call.1} parent=11 // pred_fallthru
          _
        // Predicated region
        $region17: #{tpu_custom_call.1} parent=11 // pred_check
          %p291 = pneg %p90
        $region18: #{tpu_custom_call.1} parent=11 // pred_check_branch
          %293 = sbr.rel (%p291) target = $region20
        $region19: #{tpu_custom_call.1} parent=11 // pred_region
          _
        $region20: #{tpu_custom_call.1} parent=11 // pred_fallthru
          _
        // Predicated region
        $region21: #{tpu_custom_call.1} parent=11 // pred_check
          %p294 = pneg %p111
        $region22: #{tpu_custom_call.1} parent=11 // pred_check_branch
          %296 = sbr.rel (%p294) target = $region24
        $region23: #{tpu_custom_call.1} parent=11 // pred_region
          _
        $region24: #{tpu_custom_call.1} parent=11 // pred_fallthru
          _
        // Predicated region
        $region25: #{tpu_custom_call.1} parent=11 // pred_check
          %p297 = pneg %p132
        $region26: #{tpu_custom_call.1} parent=11 // pred_check_branch
          %299 = sbr.rel (%p297) target = $region28
        $region27: #{tpu_custom_call.1} parent=11 // pred_region
          _
        $region28: #{tpu_custom_call.1} parent=11 // pred_fallthru
          _
        // Predicated region
        $region29: #{tpu_custom_call.1} parent=11 // pred_check
          %p300 = pneg %p153
        $region30: #{tpu_custom_call.1} parent=11 // pred_check_branch
          %302 = sbr.rel (%p300) target = $region32
        $region31: #{tpu_custom_call.1} parent=11 // pred_region
          %s304 = ssub.s32 512, 512
          %305 = vsyncadd [#allocation7], %s304
          %s306 = sshll.u32 [#allocation6], 4
          %s307 = int_to_ptr.vmem [resolvable:$true] %s306
          %312 = dma.hbm_to_vmem [thread:$0]  %s5, 512, %s307, [#allocation7], 128, 128, 8
        $region32: #{tpu_custom_call.1} parent=11 // pred_fallthru
          _
        // Predicated region
        $region33: #{tpu_custom_call.1} parent=11 // pred_check
          %p313 = pneg %p174
        $region34: #{tpu_custom_call.1} parent=11 // pred_check_branch
          %315 = sbr.rel (%p313) target = $region36
        $region35: #{tpu_custom_call.1} parent=11 // pred_region
          _
        $region36: #{tpu_custom_call.1} parent=11 // pred_fallthru
          _
        // Predicated region
        $region37: #{tpu_custom_call.1} parent=11 // pred_check
          %p316 = pneg %p195
        $region38: #{tpu_custom_call.1} parent=11 // pred_check_branch
          %318 = sbr.rel (%p316) target = $region40
        $region39: #{tpu_custom_call.1} parent=11 // pred_region
          %s320 = ssub.s32 512, 512
          %321 = vsyncadd [#allocation7], %s320
          %s322 = sshll.u32 [#allocation8], 4
          %s323 = int_to_ptr.vmem [resolvable:$true] %s322
          %328 = dma.hbm_to_vmem [thread:$0]  %s7, 512, %s323, [#allocation7], 128, 128, 8
        $region40: #{tpu_custom_call.1} parent=11 // pred_fallthru
          _
        // Predicated region
        $region41: #{tpu_custom_call.1} parent=11 // pred_check
          %p329 = pneg %p216
        $region42: #{tpu_custom_call.1} parent=11 // pred_check_branch
          %331 = sbr.rel (%p329) target = $region44
        $region43: #{tpu_custom_call.1} parent=11 // pred_region
          _
        $region44: #{tpu_custom_call.1} parent=11 // pred_fallthru
          _
        // Predicated region
        $region45: #{tpu_custom_call.1} parent=11 // pred_check
          %p332 = pneg %p237
        $region46: #{tpu_custom_call.1} parent=11 // pred_check_branch
          %334 = sbr.rel (%p332) target = $region48
        $region47: #{tpu_custom_call.1} parent=11 // pred_region
          _
        $region48: #{tpu_custom_call.1} parent=11 // pred_fallthru
          _
      $region12: #{tpu_custom_call.1} parent=5 // pred_fallthru
        _
      %p335 = scmp.lt.s32.totalorder %s22, 3
      // Predicated region
      $region49: #{tpu_custom_call.1} parent=5 // pred_check
        %p336 = pneg %p335
      $region50: #{tpu_custom_call.1} parent=5 // pred_check_branch
        %338 = sbr.rel (%p336) target = $region52
      $region51: #{tpu_custom_call.1} parent=5 // pred_region
        // Predicated region
        $region53: #{tpu_custom_call.1} parent=51 // pred_check
          %p339 = pneg %p42
        $region54: #{tpu_custom_call.1} parent=51 // pred_check_branch
          %341 = sbr.rel (%p339) target = $region56
        $region55: #{tpu_custom_call.1} parent=51 // pred_region
          %p342 = scmp.lt.s32.totalorder %s22, 2
          %s343 = scalar_select %p342, %s22, 2
          %s344 = smul.addr %s343, 8
          %s345 = scalar_lea.vmem %s0, %s344
        $region56: #{tpu_custom_call.1} parent=51 // pred_fallthru
          _
      $region52: #{tpu_custom_call.1} parent=5 // pred_fallthru
        _
      %p346 = scmp.le.s32.totalorder 1, %s22
      %p347 = scmp.lt.s32.totalorder %s22, 4
      %p348 = pnand %p346, %p347
      %p349 = pneg %p348
      // Predicated region
      $region57: #{tpu_custom_call.1} parent=5 // pred_check
        _
      $region58: #{tpu_custom_call.1} parent=5 // pred_check_branch
        %351 = sbr.rel (%p348) target = $region60
      $region59: #{tpu_custom_call.1} parent=5 // pred_region
        %s352 = ssub.s32 %s22, 1
        // Predicated region
        $region61: #{tpu_custom_call.1} parent=59 // pred_check
          %p353 = pneg %p69
        $region62: #{tpu_custom_call.1} parent=59 // pred_check_branch
          %355 = sbr.rel (%p353) target = $region64
        $region63: #{tpu_custom_call.1} parent=59 // pred_region
          %356 = dma.done [#allocation4], 256
        $region64: #{tpu_custom_call.1} parent=59 // pred_fallthru
          _
        // Predicated region
        $region65: #{tpu_custom_call.1} parent=59 // pred_check
          %p357 = pneg %p153
        $region66: #{tpu_custom_call.1} parent=59 // pred_check_branch
          %359 = sbr.rel (%p357) target = $region68
        $region67: #{tpu_custom_call.1} parent=59 // pred_region
          %360 = dma.done [#allocation7], 512
        $region68: #{tpu_custom_call.1} parent=59 // pred_fallthru
          _
        // Predicated region
        $region69: #{tpu_custom_call.1} parent=59 // pred_check
          %p361 = pneg %p195
        $region70: #{tpu_custom_call.1} parent=59 // pred_check_branch
          %363 = sbr.rel (%p361) target = $region72
        $region71: #{tpu_custom_call.1} parent=59 // pred_region
          %364 = dma.done [#allocation7], 512
        $region72: #{tpu_custom_call.1} parent=59 // pred_fallthru
          _
        %p365 = scmp.lt.s32.totalorder %s27, 2
        %s366 = scalar_select %p365, %s27, 2
        %s367 = smul.addr %s366, 8
        %s368 = scalar_lea.vmem %s0, %s367
        %p369 = pneg %p48
        %p370 = pneg %p45
        %p371 = pneg %p69
        %p372 = pneg %p66
        %p373 = pneg %p90
        %p374 = pneg %p87
        %p375 = pneg %p111
        %p376 = pneg %p108
        %p377 = pneg %p132
        %p378 = pneg %p129
        %p379 = pneg %p153
        %p380 = pneg %p150
        %p381 = pneg %p174
        %p382 = pneg %p171
        %p383 = pneg %p195
        %p384 = pneg %p192
        %p385 = pneg %p216
        %p386 = pneg %p213
        %p387 = pneg %p237
        %p388 = pneg %p234
        %p389 = pneg %p263
        %p390 = pneg %p260
        %s391 = sand.u32 %s250, 1
        %s392 = scalar_lea.sflag [#allocation5], %s391
        %s393 = sand.u32 %s250, 1
        %s394 = smul.addr %s393, 8
        %s395 = scalar_lea.vmem [#allocation9], %s394
        %p396 = scmp.lt.s32.totalorder %s27, 2
        %s397 = scalar_select %p396, %s27, 2
        %s398 = smul.addr %s397, 8
        %s399 = scalar_lea.vmem %s0, %s398
        %v400 = vld [vmem:[%s399] sm:$0xff]
        %v401 = vld [vmem:[#allocation3] sm:$0xff]
        %v402 = vld [vmem:[#allocation3 + $0x8] sm:$0xff]
        %v403 = vld [vmem:[%s2] sm:$0x1]
        %v405 = vlaneseq
        %v406 = vshrl.u32 %v405, 7
        %v407 = vsub.s32 0, %v406
        %v408 = vrot.slane %v403, %v407
        %vm410 = vcmask 130048
        %v412 = vsel %vm410, %v400, 0
        %414 = vmatprep.subr.mxu0 0.0
        %415 = vmatpush1.msra.mxu0 0.0
        %416 = vmatprep.subr.mxu0 0.0
        %417 = vmatpush1.msra.mxu0 0.0
        %418 = vmatprep.subr.mxu0 0.0
        %419 = vmatpush1.msra.mxu0 0.0
        %420 = vmatprep.subr.mxu0 0.0
        %421 = vmatpush1.msra.mxu0 0.0
        %422 = vmatprep.subr.mxu0 0.0
        %423 = vmatpush1.msra.mxu0 0.0
        %424 = vmatprep.subr.mxu0 0.0
        %425 = vmatpush1.msra.mxu0 0.0
        %426 = vmatprep.subr.mxu0 0.0
        %427 = vmatpush1.msra.mxu0 0.0
        %428 = vmatprep.subr.mxu0 0.0
        %429 = vmatpush1.msra.mxu0 0.0
        %430 = vmatprep.subr.mxu0 0.0
        %431 = vmatpush1.msra.mxu0 0.0
        %432 = vmatprep.subr.mxu0 0.0
        %433 = vmatpush1.msra.mxu0 0.0
        %434 = vmatprep.subr.mxu0 0.0
        %435 = vmatpush1.msra.mxu0 0.0
        %436 = vmatprep.subr.mxu0 0.0
        %437 = vmatpush1.msra.mxu0 0.0
        %438 = vmatprep.subr.mxu0 0.0
        %439 = vmatpush1.msra.mxu0 0.0
        %440 = vmatprep.subr.mxu0 0.0
        %441 = vmatpush1.msra.mxu0 0.0
        %442 = vmatprep.subr.mxu0 0.0
        %443 = vmatpush1.msra.mxu0 %v402
        %444 = vmatprep.subr.mxu0 0.0
        %445 = vmatpush1.msra.mxu0 %v401
        %446 = vmatprep.subr.mxu0 0.0
        %447 = vmatpush2.msra.mxu0 0.0
        %448 = vmatprep.subr.mxu0 0.0
        %449 = vmatpush2.msra.mxu0 0.0
        %450 = vmatprep.subr.mxu0 0.0
        %451 = vmatpush2.msra.mxu0 0.0
        %452 = vmatprep.subr.mxu0 0.0
        %453 = vmatpush2.msra.mxu0 0.0
        %454 = vmatprep.subr.mxu0 0.0
        %455 = vmatpush2.msra.mxu0 0.0
        %456 = vmatprep.subr.mxu0 0.0
        %457 = vmatpush2.msra.mxu0 0.0
        %458 = vmatprep.subr.mxu0 0.0
        %459 = vmatpush2.msra.mxu0 0.0
        %460 = vmatprep.subr.mxu0 0.0
        %461 = vmatpush2.msra.mxu0 0.0
        %462 = vmatprep.subr.mxu0 0.0
        %463 = vmatpush2.msra.mxu0 0.0
        %464 = vmatprep.subr.mxu0 0.0
        %465 = vmatpush2.msra.mxu0 0.0
        %466 = vmatprep.subr.mxu0 0.0
        %467 = vmatpush2.msra.mxu0 0.0
        %468 = vmatprep.subr.mxu0 0.0
        %469 = vmatpush2.msra.mxu0 0.0
        %470 = vmatprep.subr.mxu0 0.0
        %471 = vmatpush2.msra.mxu0 0.0
        %472 = vmatprep.subr.mxu0 0.0
        %473 = vmatpush2.msra.mxu0 0.0
        %474 = vmatprep.subr.mxu0 0.0
        %475 = vmatpush2.msra.mxu0 0.0
        %476 = vmatprep.subr.mxu0 0.0
        %477 = vmatpush2.msra.mxu0 0.0
        %478 = vmatprep.mubr.f32.mxu0 0.0
        %479 = vmatmul.mubr.f32.gmra.mxu0 %v412
        %v480 = vpop.f32.mrf.mxu0
        %v481 = vadd.f32 %v408, %v480
        %v482 = vpop.f32.mrf.mxu0
        %483 = vdwg.mxu0
        %v484 = vmax.f32 %v481, 0.0
        %v485 = vld [vmem:[%s3] sm:$0xff]
        %v486 = vld [vmem:[%s3 + $0x8] sm:$0xff]
        %v487 = vld [vmem:[%s3 + $0x10] sm:$0xff]
        %v488 = vld [vmem:[%s3 + $0x18] sm:$0xff]
        %v489 = vld [vmem:[%s4] sm:$0x1]
        %v491 = vlaneseq
        %v492 = vshrl.u32 %v491, 7
        %v493 = vsub.s32 0, %v492
        %v494 = vrot.slane %v489, %v493
        %vm496 = vcmask 261120
        %v498 = vsel %vm496, %v484, 0
        %500 = vmatprep.subr.mxu0 0.0
        %501 = vmatpush1.msra.mxu0 0.0
        %502 = vmatprep.subr.mxu0 0.0
        %503 = vmatpush1.msra.mxu0 0.0
        %504 = vmatprep.subr.mxu0 0.0
        %505 = vmatpush1.msra.mxu0 0.0
        %506 = vmatprep.subr.mxu0 0.0
        %507 = vmatpush1.msra.mxu0 0.0
        %508 = vmatprep.subr.mxu0 0.0
        %509 = vmatpush1.msra.mxu0 0.0
        %510 = vmatprep.subr.mxu0 0.0
        %511 = vmatpush1.msra.mxu0 0.0
        %512 = vmatprep.subr.mxu0 0.0
        %513 = vmatpush1.msra.mxu0 0.0
        %514 = vmatprep.subr.mxu0 0.0
        %515 = vmatpush1.msra.mxu0 0.0
        %516 = vmatprep.subr.mxu0 0.0
        %517 = vmatpush1.msra.mxu0 0.0
        %518 = vmatprep.subr.mxu0 0.0
        %519 = vmatpush1.msra.mxu0 0.0
        %520 = vmatprep.subr.mxu0 0.0
        %521 = vmatpush1.msra.mxu0 0.0
        %522 = vmatprep.subr.mxu0 0.0
        %523 = vmatpush1.msra.mxu0 0.0
        %524 = vmatprep.subr.mxu0 0.0
        %525 = vmatpush1.msra.mxu0 %v488
        %526 = vmatprep.subr.mxu0 0.0
        %527 = vmatpush1.msra.mxu0 %v487
        %528 = vmatprep.subr.mxu0 0.0
        %529 = vmatpush1.msra.mxu0 %v486
        %530 = vmatprep.subr.mxu0 0.0
        %531 = vmatpush1.msra.mxu0 %v485
        %532 = vmatprep.subr.mxu0 0.0
        %533 = vmatpush2.msra.mxu0 0.0
        %534 = vmatprep.subr.mxu0 0.0
        %535 = vmatpush2.msra.mxu0 0.0
        %536 = vmatprep.subr.mxu0 0.0
        %537 = vmatpush2.msra.mxu0 0.0
        %538 = vmatprep.subr.mxu0 0.0
        %539 = vmatpush2.msra.mxu0 0.0
        %540 = vmatprep.subr.mxu0 0.0
        %541 = vmatpush2.msra.mxu0 0.0
        %542 = vmatprep.subr.mxu0 0.0
        %543 = vmatpush2.msra.mxu0 0.0
        %544 = vmatprep.subr.mxu0 0.0
        %545 = vmatpush2.msra.mxu0 0.0
        %546 = vmatprep.subr.mxu0 0.0
        %547 = vmatpush2.msra.mxu0 0.0
        %548 = vmatprep.subr.mxu0 0.0
        %549 = vmatpush2.msra.mxu0 0.0
        %550 = vmatprep.subr.mxu0 0.0
        %551 = vmatpush2.msra.mxu0 0.0
        %552 = vmatprep.subr.mxu0 0.0
        %553 = vmatpush2.msra.mxu0 0.0
        %554 = vmatprep.subr.mxu0 0.0
        %555 = vmatpush2.msra.mxu0 0.0
        %556 = vmatprep.subr.mxu0 0.0
        %557 = vmatpush2.msra.mxu0 0.0
        %558 = vmatprep.subr.mxu0 0.0
        %559 = vmatpush2.msra.mxu0 0.0
        %560 = vmatprep.subr.mxu0 0.0
        %561 = vmatpush2.msra.mxu0 0.0
        %562 = vmatprep.subr.mxu0 0.0
        %563 = vmatpush2.msra.mxu0 0.0
        %564 = vmatprep.mubr.f32.mxu0 0.0
        %565 = vmatmul.mubr.f32.gmra.mxu0 %v498
        %v566 = vpop.f32.mrf.mxu0
        %v567 = vadd.f32 %v494, %v566
        %v568 = vpop.f32.mrf.mxu0
        %569 = vdwg.mxu0
        %v570 = vmax.f32 %v567, 0.0
        %v571 = vld [vmem:[#allocation6] sm:$0xff]
        %v572 = vld [vmem:[#allocation6 + $0x8] sm:$0xff]
        %v573 = vld [vmem:[#allocation6 + $0x10] sm:$0xff]
        %v574 = vld [vmem:[#allocation6 + $0x18] sm:$0xff]
        %v575 = vld [vmem:[%s6] sm:$0x1]
        %v577 = vlaneseq
        %v578 = vshrl.u32 %v577, 7
        %v579 = vsub.s32 0, %v578
        %v580 = vrot.slane %v575, %v579
        %v583 = vsel %vm496, %v570, 0
        %585 = vmatprep.subr.mxu0 0.0
        %586 = vmatpush1.msra.mxu0 0.0
        %587 = vmatprep.subr.mxu0 0.0
        %588 = vmatpush1.msra.mxu0 0.0
        %589 = vmatprep.subr.mxu0 0.0
        %590 = vmatpush1.msra.mxu0 0.0
        %591 = vmatprep.subr.mxu0 0.0
        %592 = vmatpush1.msra.mxu0 0.0
        %593 = vmatprep.subr.mxu0 0.0
        %594 = vmatpush1.msra.mxu0 0.0
        %595 = vmatprep.subr.mxu0 0.0
        %596 = vmatpush1.msra.mxu0 0.0
        %597 = vmatprep.subr.mxu0 0.0
        %598 = vmatpush1.msra.mxu0 0.0
        %599 = vmatprep.subr.mxu0 0.0
        %600 = vmatpush1.msra.mxu0 0.0
        %601 = vmatprep.subr.mxu0 0.0
        %602 = vmatpush1.msra.mxu0 0.0
        %603 = vmatprep.subr.mxu0 0.0
        %604 = vmatpush1.msra.mxu0 0.0
        %605 = vmatprep.subr.mxu0 0.0
        %606 = vmatpush1.msra.mxu0 0.0
        %607 = vmatprep.subr.mxu0 0.0
        %608 = vmatpush1.msra.mxu0 0.0
        %609 = vmatprep.subr.mxu0 0.0
        %610 = vmatpush1.msra.mxu0 %v574
        %611 = vmatprep.subr.mxu0 0.0
        %612 = vmatpush1.msra.mxu0 %v573
        %613 = vmatprep.subr.mxu0 0.0
        %614 = vmatpush1.msra.mxu0 %v572
        %615 = vmatprep.subr.mxu0 0.0
        %616 = vmatpush1.msra.mxu0 %v571
        %617 = vmatprep.subr.mxu0 0.0
        %618 = vmatpush2.msra.mxu0 0.0
        %619 = vmatprep.subr.mxu0 0.0
        %620 = vmatpush2.msra.mxu0 0.0
        %621 = vmatprep.subr.mxu0 0.0
        %622 = vmatpush2.msra.mxu0 0.0
        %623 = vmatprep.subr.mxu0 0.0
        %624 = vmatpush2.msra.mxu0 0.0
        %625 = vmatprep.subr.mxu0 0.0
        %626 = vmatpush2.msra.mxu0 0.0
        %627 = vmatprep.subr.mxu0 0.0
        %628 = vmatpush2.msra.mxu0 0.0
        %629 = vmatprep.subr.mxu0 0.0
        %630 = vmatpush2.msra.mxu0 0.0
        %631 = vmatprep.subr.mxu0 0.0
        %632 = vmatpush2.msra.mxu0 0.0
        %633 = vmatprep.subr.mxu0 0.0
        %634 = vmatpush2.msra.mxu0 0.0
        %635 = vmatprep.subr.mxu0 0.0
        %636 = vmatpush2.msra.mxu0 0.0
        %637 = vmatprep.subr.mxu0 0.0
        %638 = vmatpush2.msra.mxu0 0.0
        %639 = vmatprep.subr.mxu0 0.0
        %640 = vmatpush2.msra.mxu0 0.0
        %641 = vmatprep.subr.mxu0 0.0
        %642 = vmatpush2.msra.mxu0 0.0
        %643 = vmatprep.subr.mxu0 0.0
        %644 = vmatpush2.msra.mxu0 0.0
        %645 = vmatprep.subr.mxu0 0.0
        %646 = vmatpush2.msra.mxu0 0.0
        %647 = vmatprep.subr.mxu0 0.0
        %648 = vmatpush2.msra.mxu0 0.0
        %649 = vmatprep.mubr.f32.mxu0 0.0
        %650 = vmatmul.mubr.f32.gmra.mxu0 %v583
        %v651 = vpop.f32.mrf.mxu0
        %v652 = vadd.f32 %v580, %v651
        %v653 = vpop.f32.mrf.mxu0
        %654 = vdwg.mxu0
        %v655 = vmax.f32 %v652, 0.0
        %v656 = vld [vmem:[#allocation8] sm:$0xff]
        %v657 = vld [vmem:[#allocation8 + $0x8] sm:$0xff]
        %v658 = vld [vmem:[#allocation8 + $0x10] sm:$0xff]
        %v659 = vld [vmem:[#allocation8 + $0x18] sm:$0xff]
        %v660 = vld [vmem:[%s8] sm:$0x1]
        %v662 = vlaneseq
        %v663 = vshrl.u32 %v662, 7
        %v664 = vsub.s32 0, %v663
        %v665 = vrot.slane %v660, %v664
        %v668 = vsel %vm496, %v655, 0
        %670 = vmatprep.subr.mxu0 0.0
        %671 = vmatpush1.msra.mxu0 0.0
        %672 = vmatprep.subr.mxu0 0.0
        %673 = vmatpush1.msra.mxu0 0.0
        %674 = vmatprep.subr.mxu0 0.0
        %675 = vmatpush1.msra.mxu0 0.0
        %676 = vmatprep.subr.mxu0 0.0
        %677 = vmatpush1.msra.mxu0 0.0
        %678 = vmatprep.subr.mxu0 0.0
        %679 = vmatpush1.msra.mxu0 0.0
        %680 = vmatprep.subr.mxu0 0.0
        %681 = vmatpush1.msra.mxu0 0.0
        %682 = vmatprep.subr.mxu0 0.0
        %683 = vmatpush1.msra.mxu0 0.0
        %684 = vmatprep.subr.mxu0 0.0
        %685 = vmatpush1.msra.mxu0 0.0
        %686 = vmatprep.subr.mxu0 0.0
        %687 = vmatpush1.msra.mxu0 0.0
        %688 = vmatprep.subr.mxu0 0.0
        %689 = vmatpush1.msra.mxu0 0.0
        %690 = vmatprep.subr.mxu0 0.0
        %691 = vmatpush1.msra.mxu0 0.0
        %692 = vmatprep.subr.mxu0 0.0
        %693 = vmatpush1.msra.mxu0 0.0
        %694 = vmatprep.subr.mxu0 0.0
        %695 = vmatpush1.msra.mxu0 %v659
        %696 = vmatprep.subr.mxu0 0.0
        %697 = vmatpush1.msra.mxu0 %v658
        %698 = vmatprep.subr.mxu0 0.0
        %699 = vmatpush1.msra.mxu0 %v657
        %700 = vmatprep.subr.mxu0 0.0
        %701 = vmatpush1.msra.mxu0 %v656
        %702 = vmatprep.subr.mxu0 0.0
        %703 = vmatpush2.msra.mxu0 0.0
        %704 = vmatprep.subr.mxu0 0.0
        %705 = vmatpush2.msra.mxu0 0.0
        %706 = vmatprep.subr.mxu0 0.0
        %707 = vmatpush2.msra.mxu0 0.0
        %708 = vmatprep.subr.mxu0 0.0
        %709 = vmatpush2.msra.mxu0 0.0
        %710 = vmatprep.subr.mxu0 0.0
        %711 = vmatpush2.msra.mxu0 0.0
        %712 = vmatprep.subr.mxu0 0.0
        %713 = vmatpush2.msra.mxu0 0.0
        %714 = vmatprep.subr.mxu0 0.0
        %715 = vmatpush2.msra.mxu0 0.0
        %716 = vmatprep.subr.mxu0 0.0
        %717 = vmatpush2.msra.mxu0 0.0
        %718 = vmatprep.subr.mxu0 0.0
        %719 = vmatpush2.msra.mxu0 0.0
        %720 = vmatprep.subr.mxu0 0.0
        %721 = vmatpush2.msra.mxu0 0.0
        %722 = vmatprep.subr.mxu0 0.0
        %723 = vmatpush2.msra.mxu0 0.0
        %724 = vmatprep.subr.mxu0 0.0
        %725 = vmatpush2.msra.mxu0 0.0
        %726 = vmatprep.subr.mxu0 0.0
        %727 = vmatpush2.msra.mxu0 0.0
        %728 = vmatprep.subr.mxu0 0.0
        %729 = vmatpush2.msra.mxu0 0.0
        %730 = vmatprep.subr.mxu0 0.0
        %731 = vmatpush2.msra.mxu0 0.0
        %732 = vmatprep.subr.mxu0 0.0
        %733 = vmatpush2.msra.mxu0 0.0
        %734 = vmatprep.mubr.f32.mxu0 0.0
        %735 = vmatmul.mubr.f32.gmra.mxu0 %v668
        %v736 = vpop.f32.mrf.mxu0
        %v737 = vadd.f32 %v665, %v736
        %v738 = vpop.f32.mrf.mxu0
        %739 = vdwg.mxu0
        %740 = vmax.xlane.f32.xlu0 %v737
        %v741 = vpop.xlane.xlu0 %740
        %v742 = vsub.f32 %v737, %v741
        %v743 = vmul.f32 %v742, 1.442695
        %v744 = vpow.pop %v743
        %745 = vadd.xlane.f32.xlu0 %v744
        %v746 = vpop.xlane.xlu0 %745
        %s747 = sld [smem:[#allocation2]]
        %v748 = vrcp.pop %v746
        %v749 = vstv %s747
        %v750 = vmul.f32 %v749, %v748
        %v751 = vmul.f32 %v744, %v750
        %752 = vst [vmem:[%s395] sm:$0xff] %v751
        %s753 = sand.u32 %s250, 1
        %s754 = scalar_lea.sflag [#allocation5], %s753
        %s755 = sand.u32 %s250, 1
        %s756 = smul.addr %s755, 8
        %s757 = scalar_lea.vmem [#allocation9], %s756
        // Predicated region
        $region73: #{tpu_custom_call.1} parent=59 // pred_check
          %p758 = pneg %p260
        $region74: #{tpu_custom_call.1} parent=59 // pred_check_branch
          %760 = sbr.rel (%p758) target = $region76
        $region75: #{tpu_custom_call.1} parent=59 // pred_region
          %s762 = ssub.s32 128, 128
          %763 = vsyncadd %s754, %s762
          %s764 = smul.addr %s27, 128
          %s765 = scalar_lea.hbm %s10, %s764
          %s767 = sshll.u32 %s757, 4
          %s768 = int_to_ptr.vmem [resolvable:$true] %s767
          %770 = dma.vmem_to_hbm [thread:$0]  %s768, 128, %s765, %s754
        $region76: #{tpu_custom_call.1} parent=59 // pred_fallthru
          _
      $region60: #{tpu_custom_call.1} parent=5 // pred_fallthru
        _
      %p771 = scmp.le.s32.totalorder 2, %s22
      // Predicated region
      $region77: #{tpu_custom_call.1} parent=5 // pred_check
        %p772 = pneg %p771
      $region78: #{tpu_custom_call.1} parent=5 // pred_check_branch
        %774 = sbr.rel (%p772) target = $region80
      $region79: #{tpu_custom_call.1} parent=5 // pred_region
        %s775 = ssub.s32 %s22, 2
        // Predicated region
        $region81: #{tpu_custom_call.1} parent=79 // pred_check
          %p776 = pneg %p266
        $region82: #{tpu_custom_call.1} parent=79 // pred_check_branch
          %778 = sbr.rel (%p776) target = $region84
        $region83: #{tpu_custom_call.1} parent=79 // pred_region
          %s779 = sand.u32 %s251, 1
          %s780 = scalar_lea.sflag [#allocation5], %s779
          %s781 = sand.u32 %s251, 1
          %s782 = smul.addr %s781, 8
          %s783 = scalar_lea.vmem [#allocation9], %s782
          %784 = dma.done %s780, 128
        $region84: #{tpu_custom_call.1} parent=79 // pred_fallthru
          _
      $region80: #{tpu_custom_call.1} parent=5 // pred_fallthru
        _
    $region6: #{tpu_custom_call.1} parent=1 // loop_footer
      %s26 = sadd.s32 1, %s22
    $region7: #{tpu_custom_call.1} parent=1 // loop_footer_branch
      %21 = sbr.rel target = $region3
    $region8: #{tpu_custom_call.1} parent=1 // loop_exit
      _
    %785 = vsyncpa [#allocation4], 1
    %s786 = scalar_lea.sflag [#allocation4], 1
    %787 = vsyncpa %s786, 1
    %788 = vsyncpa [#allocation7], 1
    %789 = vsyncpa [#allocation5], 1
    %s790 = scalar_lea.sflag [#allocation5], 1
    %791 = vsyncpa %s790, 1

</llo_original>
